<compile_context>
chip_gen: v5e
topology: v5e:2x2
jax: 0.10.0
libtpu: 0.0.40
codegen_flags: <defaults>
</compile_context>

<pallas_src>
import functools
import math

import jax
import jax.numpy as jnp
from jax.experimental import pallas as pl
from jax.experimental.pallas import tpu as pltpu


def _round_up(x, m):
    return ((x + m - 1) // m) * m


def _apply_activation(y, activation, approx_sigmoid=False):
    if activation == "sigmoid":
        # exp on the EUP; with approx=True the reciprocal also goes to the EUP
        # (vrcp) and co-issues with MXU/VALU work.
        e = jnp.exp(-y)
        return pl.reciprocal(1.0 + e, approx=approx_sigmoid)
    if activation == "tanh":
        return jnp.tanh(y)
    if activation == "relu":
        return jnp.maximum(y, 0.0)
    if activation == "sin":
        return jnp.sin(y)
    return y  # None -> identity


def _fused_mlp_kernel(*refs, layer_has_bias, activation, approx_sigmoid,
                      compute_dtype):
    """refs = [x_ref, w1, (b1), w2, (b2), ..., wN, out_ref].

    Every layer: MXU matmul (f32 accumulation) + f32 bias add + f32
    activation; the inter-layer activation is stored in compute_dtype
    (bf16 fast path halves vreg/VMEM footprint for wide hidden layers).
    Weights/x arrive already in compute_dtype (pre-cast in the wrapper),
    biases arrive in f32.
    """
    x_ref = refs[0]
    o_ref = refs[-1]
    param_refs = refs[1:-1]

    n_layers = len(layer_has_bias)
    h = x_ref[...]                       # (tm, K_pad), compute_dtype
    idx = 0
    for li, has_bias in enumerate(layer_has_bias):
        w = param_refs[idx][...]         # compute_dtype, no per-step cast
        idx += 1
        y = jnp.dot(h, w, preferred_element_type=jnp.float32)
        if has_bias:
            y = y + param_refs[idx][...]  # f32 (1, N) broadcast
            idx += 1
        if li != n_layers - 1:
            y = _apply_activation(y, activation, approx_sigmoid)
            h = y.astype(compute_dtype)   # keep hidden state in compute dtype
        else:
            h = y                         # final layer: stay f32 until store
    o_ref[...] = h.astype(o_ref.dtype)


def mlp_forward(x, params, activation="sigmoid", *,
                compute_dtype=jnp.float32, approx_sigmoid=False,
                block_m=256, out_dtype=None):
    """Fused MLP forward: one pallas_call for the whole network.

    x:      (M, input_size)
    params: list of (w, b) with w (fan_in, fan_out), b (fan_out,) or None.

    Fast path (recommended on v5e/v6e/v7x when ~1e-2 accuracy is acceptable):
      compute_dtype=jnp.bfloat16, approx_sigmoid=True
    bf16 operands hit the native MXU rate (f32 accumulation is kept via
    preferred_element_type) and halve weight DMA/VMEM; approx_sigmoid moves
    the reciprocal onto the EUP. The f32 default keeps exact 1e-5 accuracy.
    NOTE (v7x): the MXU has no int8 path -- any future quantization should
    target fp8, not int8.
    """
    M, K = x.shape
    out_dtype = out_dtype or x.dtype
    cd = jnp.dtype(compute_dtype)
    k_pad = _round_up(K, 128)

    # ---- batch tiling ----
    # (a) tile rows bounded (softly) by block_m, always a multiple of 8,
    # (b) >= 2 grid steps whenever the batch allows it (v7x has 2 TCs and the
    #     axis is "parallel"; extra steps are cheap on single-TC v5e/v6e),
    # (c) tm chosen from M itself so tail zero-padding stays < 8 rows beyond
    #     round_up(M, 8) (no wasted all-zero grid steps).
    n_steps = max(pl.cdiv(M, block_m), 2 if _round_up(M, 8) >= 16 else 1)
    tm = _round_up(pl.cdiv(M, n_steps), 8)
    m_pad = tm * n_steps

    # ---- lane-dense zero padding + pre-cast to compute_dtype (wrapper) ----
    x_p = jnp.zeros((m_pad, k_pad), cd).at[:M, :K].set(x.astype(cd))

    inputs = [x_p]
    in_specs = [pl.BlockSpec((tm, k_pad), lambda i: (i, 0))]
    layer_has_bias = []
    in_dim = k_pad
    flops = 0
    transcendentals = 0
    n_l = len(params)
    for li, (w, b) in enumerate(params):
        fi, fo = w.shape
        fo_pad = _round_up(fo, 128)
        # INVARIANT: padded weight rows/cols (and padded bias entries) are
        # zero so padded hidden columns (act(0), e.g. sigmoid->0.5) never
        # contribute downstream.  Results are exact up to dtype rounding.
        w_p = jnp.zeros((in_dim, fo_pad), cd).at[:fi, :fo].set(w.astype(cd))
        inputs.append(w_p)
        # Constant index_map -> never re-fetched -> single buffer is enough.
        in_specs.append(pl.BlockSpec((in_dim, fo_pad), lambda i: (0, 0),
                                     pipeline_mode=pl.Buffered(1)))
        if b is not None:
            b_p = jnp.zeros((1, fo_pad), jnp.float32).at[0, :fo].set(
                b.astype(jnp.float32))
            inputs.append(b_p)
            in_specs.append(pl.BlockSpec((1, fo_pad), lambda i: (0, 0),
                                         pipeline_mode=pl.Buffered(1)))
        layer_has_bias.append(b is not None)
        flops += 2 * m_pad * in_dim * fo_pad
        if li != n_l - 1 and activation in ("sigmoid", "tanh", "sin"):
            transcendentals += m_pad * fo_pad
        in_dim = fo_pad
    o_pad = in_dim
    fo_last = params[-1][0].shape[1]

    out_shape = jax.ShapeDtypeStruct((m_pad, o_pad), out_dtype)
    out_spec = pl.BlockSpec((tm, o_pad), lambda i: (i, 0))

    # ---- VMEM budget: weights/biases single-buffered + double-buffered
    #      x/out tiles, capped by the device's physical VMEM with headroom.
    resident = sum(a.size * a.dtype.itemsize for a in inputs[1:])
    resident += 2 * tm * k_pad * cd.itemsize
    resident += 2 * tm * o_pad * jnp.dtype(out_dtype).itemsize
    try:
        vmem_cap = int(pltpu.get_tpu_info().vmem_capacity_bytes)
    except Exception:
        vmem_cap = 64 * 2**20  # conservative: v7x per-TensorCore VMEM
    vmem_limit = int(min(0.85 * vmem_cap,
                         max(32 * 2**20, 2 * resident + (4 << 20))))

    bytes_accessed = (sum(a.size * a.dtype.itemsize for a in inputs)
                      + m_pad * o_pad * jnp.dtype(out_dtype).itemsize)
    cost = pl.CostEstimate(flops=flops, transcendentals=transcendentals,
                           bytes_accessed=bytes_accessed)

    kernel = functools.partial(
        _fused_mlp_kernel,
        layer_has_bias=tuple(layer_has_bias),
        activation=activation,
        approx_sigmoid=approx_sigmoid,
        compute_dtype=cd,
    )

    out = pl.pallas_call(
        kernel,
        out_shape=out_shape,
        grid=(n_steps,),
        in_specs=in_specs,
        out_specs=out_spec,
        compiler_params=pltpu.CompilerParams(
            dimension_semantics=("parallel",),
            vmem_limit_bytes=vmem_limit,
        ),
        cost_estimate=cost,
    )(*inputs)

    return out[:M, :fo_last]


def init_mlp_params(key, input_size, num_layers, layer_size, output_size):
    """Deterministic params, PyTorch-Linear-style uniform(-1/sqrt(fan_in), +)."""
    params = []
    sizes = [(input_size, layer_size)]
    for _ in range(1, num_layers - 1):
        sizes.append((layer_size, layer_size))
    sizes.append((layer_size, output_size))
    for li, (fan_in, fan_out) in enumerate(sizes):
        key, kw, kb = jax.random.split(key, 3)
        bound = 1.0 / math.sqrt(fan_in)
        w = jax.random.uniform(
            kw, (fan_in, fan_out), jnp.float32, minval=-bound, maxval=bound
        )
        is_last = li == len(sizes) - 1
        b = None
        if not is_last:
            b = jax.random.uniform(
                kb, (fan_out,), jnp.float32, minval=-bound, maxval=bound
            )
        params.append((w, b))
    return params


def _ref_activation(y, activation):
    if activation == "sigmoid":
        return jax.nn.sigmoid(y)
    if activation == "tanh":
        return jnp.tanh(y)
    if activation == "relu":
        return jnp.maximum(y, 0.0)
    if activation == "sin":
        return jnp.sin(y)
    return y


def mlp_forward_ref(x, params, activation="sigmoid"):
    n = len(params)
    for li, (w, b) in enumerate(params):
        y = x @ w
        if b is not None:
            y = y + b
        if li != n - 1:
            y = _ref_activation(y, activation)
        x = y
    return x


if __name__ == "__main__":
    # Config matching the PyTorch module defaults: 3 layers, sigmoid, p=0.0.
    batch = 8
    input_size = 16
    num_layers = 3
    layer_size = 32
    output_size = 8
    activation = "sigmoid"

    key = jax.random.PRNGKey(0)
    key, kx = jax.random.split(key)
    x = jax.random.normal(kx, (batch, input_size), jnp.float32)
    params = init_mlp_params(key, input_size, num_layers, layer_size,
                             output_size)

    # Exact path (f32 compute, exact sigmoid) -> strict tolerance.
    out = jax.block_until_ready(mlp_forward(x, params, activation=activation))
    ref = mlp_forward_ref(x, params, activation=activation)
    assert out.shape == (batch, output_size)
    assert jnp.allclose(out, ref, atol=1e-5, rtol=1e-5), "mismatch (sigmoid)"

    # Odd sizes, deeper, tanh: exercises generic fusion + lane/sublane padding.
    key2 = jax.random.PRNGKey(0)
    key2, kx2 = jax.random.split(key2)
    x2 = jax.random.normal(kx2, (5, 20), jnp.float32)
    params2 = init_mlp_params(key2, 20, 4, 48, 10)
    out2 = jax.block_until_ready(mlp_forward(x2, params2, activation="tanh"))
    ref2 = mlp_forward_ref(x2, params2, activation="tanh")
    assert out2.shape == (5, 10)
    assert jnp.allclose(out2, ref2, atol=1e-5, rtol=1e-5), "mismatch (tanh)"

    # Fast path (bf16 MXU operands, approx sigmoid, >=2 grid steps): looser
    # tolerance, verifies the padding invariants hold under pre-cast weights.
    key3 = jax.random.PRNGKey(0)
    key3, kx3 = jax.random.split(key3)
    x3 = jax.random.normal(kx3, (16, 16), jnp.float32)
    params3 = init_mlp_params(key3, 16, 3, 32, 8)
    out3 = jax.block_until_ready(
        mlp_forward(x3, params3, activation="sigmoid",
                    compute_dtype=jnp.bfloat16, approx_sigmoid=True))
    ref3 = mlp_forward_ref(x3, params3, activation="sigmoid")
    assert out3.shape == (16, 8)
    assert jnp.allclose(out3, ref3, atol=5e-2, rtol=5e-2), "mismatch (bf16)"

    print("KERNEL_OK")
</pallas_src>

<mosaic_0001>
module attributes {stable_mosaic.version = 11 : i64} {
  func.func @_fused_mlp_kernel(%arg0: i32, %arg1: memref<8x128xf32, #tpu.memory_space<vmem>>, %arg2: memref<128x128xf32, #tpu.memory_space<vmem>>, %arg3: memref<1x128xf32, #tpu.memory_space<vmem>>, %arg4: memref<128x128xf32, #tpu.memory_space<vmem>>, %arg5: memref<1x128xf32, #tpu.memory_space<vmem>>, %arg6: memref<128x128xf32, #tpu.memory_space<vmem>>, %arg7: memref<8x128xf32, #tpu.memory_space<vmem>>) attributes {dimension_semantics = [#tpu.dimension_semantics<parallel>], iteration_bounds = array<i64: 1>, scalar_prefetch = 0 : i64, scratch_operands = 0 : i64, tpu.core_type = #tpu.core_type<tc>, window_params = [{transform_indices = @transform_0, window_bounds = array<i64: 8, 128>}, {pipeline_mode = #tpu.pipeline_mode<synchronous>, transform_indices = @transform_1, window_bounds = array<i64: 128, 128>}, {pipeline_mode = #tpu.pipeline_mode<synchronous>, transform_indices = @transform_2, window_bounds = array<i64: 1, 128>}, {pipeline_mode = #tpu.pipeline_mode<synchronous>, transform_indices = @transform_3, window_bounds = array<i64: 128, 128>}, {pipeline_mode = #tpu.pipeline_mode<synchronous>, transform_indices = @transform_4, window_bounds = array<i64: 1, 128>}, {pipeline_mode = #tpu.pipeline_mode<synchronous>, transform_indices = @transform_5, window_bounds = array<i64: 128, 128>}, {transform_indices = @transform_6, window_bounds = array<i64: 8, 128>}]} {
    %c0 = arith.constant 0 : index
    %c0_0 = arith.constant 0 : index
    %0 = vector.load %arg1[%c0, %c0_0] : memref<8x128xf32, #tpu.memory_space<vmem>>, vector<8x128xf32>
    %c0_1 = arith.constant 0 : index
    %c0_2 = arith.constant 0 : index
    %1 = vector.load %arg2[%c0_1, %c0_2] : memref<128x128xf32, #tpu.memory_space<vmem>>, vector<128x128xf32>
    %cst = arith.constant dense<0.000000e+00> : vector<8x128xf32>
    %2 = tpu.matmul %0, %1, %cst {dimension_numbers = #tpu.dot_dimension_numbers<[1], [0], [0], [1], [0, 0, 1, 1], [], []>} : vector<8x128xf32>, vector<128x128xf32>, vector<8x128xf32> -> vector<8x128xf32>
    %c0_3 = arith.constant 0 : index
    %c0_4 = arith.constant 0 : index
    %3 = vector.load %arg3[%c0_3, %c0_4] : memref<1x128xf32, #tpu.memory_space<vmem>>, vector<1x128xf32>
    %4 = vector.broadcast %3 : vector<1x128xf32> to vector<8x128xf32>
    %5 = arith.addf %2, %4 : vector<8x128xf32>
    %cst_5 = arith.constant 0.000000e+00 : f32
    %6 = vector.broadcast %cst_5 : f32 to vector<8x128xf32>
    %7 = arith.subf %6, %5 : vector<8x128xf32>
    %8 = math.exp %7 : vector<8x128xf32>
    %cst_6 = arith.constant 1.000000e+00 : f32
    %9 = vector.broadcast %cst_6 : f32 to vector<8x128xf32>
    %10 = arith.addf %9, %8 : vector<8x128xf32>
    %11 = tpu.reciprocal %10 : vector<8x128xf32> -> vector<8x128xf32>
    %c0_7 = arith.constant 0 : index
    %c0_8 = arith.constant 0 : index
    %12 = vector.load %arg4[%c0_7, %c0_8] : memref<128x128xf32, #tpu.memory_space<vmem>>, vector<128x128xf32>
    %cst_9 = arith.constant dense<0.000000e+00> : vector<8x128xf32>
    %13 = tpu.matmul %11, %12, %cst_9 {dimension_numbers = #tpu.dot_dimension_numbers<[1], [0], [0], [1], [0, 0, 1, 1], [], []>} : vector<8x128xf32>, vector<128x128xf32>, vector<8x128xf32> -> vector<8x128xf32>
    %c0_10 = arith.constant 0 : index
    %c0_11 = arith.constant 0 : index
    %14 = vector.load %arg5[%c0_10, %c0_11] : memref<1x128xf32, #tpu.memory_space<vmem>>, vector<1x128xf32>
    %15 = vector.broadcast %14 : vector<1x128xf32> to vector<8x128xf32>
    %16 = arith.addf %13, %15 : vector<8x128xf32>
    %cst_12 = arith.constant 0.000000e+00 : f32
    %17 = vector.broadcast %cst_12 : f32 to vector<8x128xf32>
    %18 = arith.subf %17, %16 : vector<8x128xf32>
    %19 = math.exp %18 : vector<8x128xf32>
    %cst_13 = arith.constant 1.000000e+00 : f32
    %20 = vector.broadcast %cst_13 : f32 to vector<8x128xf32>
    %21 = arith.addf %20, %19 : vector<8x128xf32>
    %22 = tpu.reciprocal %21 : vector<8x128xf32> -> vector<8x128xf32>
    %c0_14 = arith.constant 0 : index
    %c0_15 = arith.constant 0 : index
    %23 = vector.load %arg6[%c0_14, %c0_15] : memref<128x128xf32, #tpu.memory_space<vmem>>, vector<128x128xf32>
    %cst_16 = arith.constant dense<0.000000e+00> : vector<8x128xf32>
    %24 = tpu.matmul %22, %23, %cst_16 {dimension_numbers = #tpu.dot_dimension_numbers<[1], [0], [0], [1], [0, 0, 1, 1], [], []>} : vector<8x128xf32>, vector<128x128xf32>, vector<8x128xf32> -> vector<8x128xf32>
    %c0_17 = arith.constant 0 : index
    %c0_18 = arith.constant 0 : index
    %25 = vector.load %arg7[%c0_17, %c0_18] : memref<8x128xf32, #tpu.memory_space<vmem>>, vector<8x128xf32>
    tpu.vector_store %arg7[%c0_17, %c0_18], %24 {strides = array<i32>} : memref<8x128xf32, #tpu.memory_space<vmem>>, vector<8x128xf32>,
    return
  }
  func.func @transform_0(%arg0: i32) -> (i32, i32) {
    %c0_i32 = arith.constant 0 : i32
    %c0_i32_0 = arith.constant 0 : i32
    return %arg0, %c0_i32 : i32, i32
  }
  func.func @transform_1(%arg0: i32) -> (i32, i32) {
    %c0_i32 = arith.constant 0 : i32
    %c0_i32_0 = arith.constant 0 : i32
    %c0_i32_1 = arith.constant 0 : i32
    return %c0_i32, %c0_i32_0 : i32, i32
  }
  func.func @transform_2(%arg0: i32) -> (i32, i32) {
    %c0_i32 = arith.constant 0 : i32
    %c0_i32_0 = arith.constant 0 : i32
    %c0_i32_1 = arith.constant 0 : i32
    return %c0_i32, %c0_i32_0 : i32, i32
  }
  func.func @transform_3(%arg0: i32) -> (i32, i32) {
    %c0_i32 = arith.constant 0 : i32
    %c0_i32_0 = arith.constant 0 : i32
    %c0_i32_1 = arith.constant 0 : i32
    return %c0_i32, %c0_i32_0 : i32, i32
  }
  func.func @transform_4(%arg0: i32) -> (i32, i32) {
    %c0_i32 = arith.constant 0 : i32
    %c0_i32_0 = arith.constant 0 : i32
    %c0_i32_1 = arith.constant 0 : i32
    return %c0_i32, %c0_i32_0 : i32, i32
  }
  func.func @transform_5(%arg0: i32) -> (i32, i32) {
    %c0_i32 = arith.constant 0 : i32
    %c0_i32_0 = arith.constant 0 : i32
    %c0_i32_1 = arith.constant 0 : i32
    return %c0_i32, %c0_i32_0 : i32, i32
  }
  func.func @transform_6(%arg0: i32) -> (i32, i32) {
    %c0_i32 = arith.constant 0 : i32
    %c0_i32_0 = arith.constant 0 : i32
    return %arg0, %c0_i32 : i32, i32
  }
}

</mosaic_0001>

<llo_original>
// kernel: tpu_custom_call.1
$region0: #{tpu_custom_call.1}
  #allocation0 [shape = 'u32[]', space=smem, size = 0x4, offset = 0x4, fixed_abs, tag = 'smem constant byte address 0x4 - core index']
  #allocation1 [shape = 'u32[72,128]{1,0:T(1,128)}', space=vmem, size = 0x9000, scoped, tag = 'internal scratch']
  %s0 = inlined_call_operand.hbm [shape: f32[8,128], index: 0, kind: input, shape index: {}]
  %s1 = inlined_call_operand.hbm [shape: f32[128,128], index: 1, kind: input, shape index: {}]
  %s2 = inlined_call_operand.vmem [shape: f32[1,128], index: 2, kind: input, shape index: {}]
  %s3 = inlined_call_operand.hbm [shape: f32[128,128], index: 3, kind: input, shape index: {}]
  %s4 = inlined_call_operand.vmem [shape: f32[1,128], index: 4, kind: input, shape index: {}]
  %s5 = inlined_call_operand.hbm [shape: f32[128,128], index: 5, kind: input, shape index: {}]
  %s6 = inlined_call_operand.hbm [shape: f32[8,128], index: 6, kind: output, shape index: {}]
  %s7 = sld [smem:[#allocation0]]
  $region50: #{tpu_custom_call.1} parent=0
    _
  %s9 = ssub.s32 1, %s7
  %s10 = scalar_select 0, %s9, %s7
  $region1: #{tpu_custom_call.1} parent=0
    #allocation2 [shape = 'u8[4096]{0}', space=vmem, size = 0x1000, scoped, tag = 'input window, operand 0, single buffered']
    #allocation3 [shape = 's32[1]{0}', space=sflag, size = 0x4, scoped, tag = 'scoped memory for tpu_custom_call.1']
    #allocation4 [shape = 's32[1]{0}', space=sflag, size = 0x4, scoped, tag = 'scoped memory for tpu_custom_call.1']
    #allocation5 [shape = 'u8[65536]{0}', space=vmem, size = 0x10000, scoped, tag = 'input window, operand 1, single buffered']
    #allocation6 [shape = 's32[1]{0}', space=sflag, size = 0x4, scoped, tag = 'scoped memory for tpu_custom_call.1']
    #allocation7 [shape = 'u8[65536]{0}', space=vmem, size = 0x10000, scoped, tag = 'input window, operand 3, single buffered']
    #allocation8 [shape = 'u8[65536]{0}', space=vmem, size = 0x10000, scoped, tag = 'input window, operand 5, single buffered']
    #allocation9 [shape = 's32[1]{0}', space=sflag, size = 0x4, scoped, tag = 'scoped memory for tpu_custom_call.1']
    #allocation10 [shape = 'u8[4096]{0}', space=vmem, size = 0x1000, scoped, tag = 'output window, operand 0, single buffered']
    %11 = vsyncpa [#allocation3], 0
    %12 = vsyncpa [#allocation6], 0
    %13 = vsyncpa [#allocation9], 0
    %14 = vsyncpa [#allocation4], 0
    // Predicated region
    $region2: #{tpu_custom_call.1} parent=1 // pred_check
      _
    $region3: #{tpu_custom_call.1} parent=1 // pred_check_branch
      %16 = sbr.rel (0) target = $region5
    $region4: #{tpu_custom_call.1} parent=1 // pred_region
      %18 = vsyncadd [#allocation3], 0
      %s20 = sshll.u32 %s0, 4
      %s21 = int_to_ptr.hbm [resolvable:$true] %s20
      %s22 = sshll.u32 [#allocation2], 4
      %s23 = int_to_ptr.vmem [resolvable:$true] %s22
      %25 = dma.hbm_to_vmem [thread:$0]  %s21, 128, %s23, [#allocation3]
    $region5: #{tpu_custom_call.1} parent=1 // pred_fallthru
      _
    // Predicated region
    $region6: #{tpu_custom_call.1} parent=1 // pred_check
      _
    $region7: #{tpu_custom_call.1} parent=1 // pred_check_branch
      %27 = sbr.rel (0) target = $region9
    $region8: #{tpu_custom_call.1} parent=1 // pred_region
      %29 = vsyncadd [#allocation6], 0
      %s30 = sshll.u32 %s1, 4
      %s31 = int_to_ptr.hbm [resolvable:$true] %s30
      %s32 = sshll.u32 [#allocation5], 4
      %s33 = int_to_ptr.vmem [resolvable:$true] %s32
      %38 = dma.hbm_to_vmem [thread:$0]  %s31, 2048, %s33, [#allocation6], 128, 128, 8
    $region9: #{tpu_custom_call.1} parent=1 // pred_fallthru
      _
    // Predicated region
    $region10: #{tpu_custom_call.1} parent=1 // pred_check
      _
    $region11: #{tpu_custom_call.1} parent=1 // pred_check_branch
      %40 = sbr.rel (0) target = $region13
    $region12: #{tpu_custom_call.1} parent=1 // pred_region
      _
    $region13: #{tpu_custom_call.1} parent=1 // pred_fallthru
      _
    // Predicated region
    $region14: #{tpu_custom_call.1} parent=1 // pred_check
      _
    $region15: #{tpu_custom_call.1} parent=1 // pred_check_branch
      %42 = sbr.rel (0) target = $region17
    $region16: #{tpu_custom_call.1} parent=1 // pred_region
      %44 = vsyncadd [#allocation6], 0
      %s45 = sshll.u32 %s3, 4
      %s46 = int_to_ptr.hbm [resolvable:$true] %s45
      %s47 = sshll.u32 [#allocation7], 4
      %s48 = int_to_ptr.vmem [resolvable:$true] %s47
      %53 = dma.hbm_to_vmem [thread:$0]  %s46, 2048, %s48, [#allocation6], 128, 128, 8
    $region17: #{tpu_custom_call.1} parent=1 // pred_fallthru
      _
    // Predicated region
    $region18: #{tpu_custom_call.1} parent=1 // pred_check
      _
    $region19: #{tpu_custom_call.1} parent=1 // pred_check_branch
      %55 = sbr.rel (0) target = $region21
    $region20: #{tpu_custom_call.1} parent=1 // pred_region
      _
    $region21: #{tpu_custom_call.1} parent=1 // pred_fallthru
      _
    // Predicated region
    $region22: #{tpu_custom_call.1} parent=1 // pred_check
      _
    $region23: #{tpu_custom_call.1} parent=1 // pred_check_branch
      %57 = sbr.rel (0) target = $region25
    $region24: #{tpu_custom_call.1} parent=1 // pred_region
      %59 = vsyncadd [#allocation9], 0
      %s60 = sshll.u32 %s5, 4
      %s61 = int_to_ptr.hbm [resolvable:$true] %s60
      %s62 = sshll.u32 [#allocation8], 4
      %s63 = int_to_ptr.vmem [resolvable:$true] %s62
      %68 = dma.hbm_to_vmem [thread:$0]  %s61, 2048, %s63, [#allocation9], 128, 128, 8
    $region25: #{tpu_custom_call.1} parent=1 // pred_fallthru
      _
    // Predicated region
    $region26: #{tpu_custom_call.1} parent=1 // pred_check
      _
    $region27: #{tpu_custom_call.1} parent=1 // pred_check_branch
      %70 = sbr.rel (0) target = $region29
    $region28: #{tpu_custom_call.1} parent=1 // pred_region
      %72 = dma.done [#allocation3], 128
    $region29: #{tpu_custom_call.1} parent=1 // pred_fallthru
      _
    // Predicated region
    $region30: #{tpu_custom_call.1} parent=1 // pred_check
      _
    $region31: #{tpu_custom_call.1} parent=1 // pred_check_branch
      %74 = sbr.rel (0) target = $region33
    $region32: #{tpu_custom_call.1} parent=1 // pred_region
      %76 = dma.done [#allocation6], 2048
    $region33: #{tpu_custom_call.1} parent=1 // pred_fallthru
      _
    // Predicated region
    $region34: #{tpu_custom_call.1} parent=1 // pred_check
      _
    $region35: #{tpu_custom_call.1} parent=1 // pred_check_branch
      %78 = sbr.rel (0) target = $region37
    $region36: #{tpu_custom_call.1} parent=1 // pred_region
      %80 = dma.done [#allocation6], 2048
    $region37: #{tpu_custom_call.1} parent=1 // pred_fallthru
      _
    // Predicated region
    $region38: #{tpu_custom_call.1} parent=1 // pred_check
      _
    $region39: #{tpu_custom_call.1} parent=1 // pred_check_branch
      %82 = sbr.rel (0) target = $region41
    $region40: #{tpu_custom_call.1} parent=1 // pred_region
      %84 = dma.done [#allocation9], 2048
    $region41: #{tpu_custom_call.1} parent=1 // pred_fallthru
      _
    %v85 = vld [vmem:[#allocation2] sm:$0xff]
    %v86 = vld [vmem:[#allocation5] sm:$0xff]
    %v87 = vld [vmem:[#allocation5 + $0x8] sm:$0xff]
    %v88 = vld [vmem:[#allocation5 + $0x10] sm:$0xff]
    %v89 = vld [vmem:[#allocation5 + $0x18] sm:$0xff]
    %v90 = vld [vmem:[#allocation5 + $0x20] sm:$0xff]
    %v91 = vld [vmem:[#allocation5 + $0x28] sm:$0xff]
    %v92 = vld [vmem:[#allocation5 + $0x30] sm:$0xff]
    %v93 = vld [vmem:[#allocation5 + $0x38] sm:$0xff]
    %v94 = vld [vmem:[#allocation5 + $0x40] sm:$0xff]
    %v95 = vld [vmem:[#allocation5 + $0x48] sm:$0xff]
    %v96 = vld [vmem:[#allocation5 + $0x50] sm:$0xff]
    %v97 = vld [vmem:[#allocation5 + $0x58] sm:$0xff]
    %v98 = vld [vmem:[#allocation5 + $0x60] sm:$0xff]
    %v99 = vld [vmem:[#allocation5 + $0x68] sm:$0xff]
    %v100 = vld [vmem:[#allocation5 + $0x70] sm:$0xff]
    %v101 = vld [vmem:[#allocation5 + $0x78] sm:$0xff]
    %v102 = vld [vmem:[%s2] sm:$0x1]
    %v104 = vperm.slane %v102, 0
    %106 = vmatpush.msra.mxu0 %v101
    %107 = vmatpush.msra.mxu0 %v100
    %108 = vmatpush.msra.mxu0 %v99
    %109 = vmatpush.msra.mxu0 %v98
    %110 = vmatpush.msra.mxu0 %v97
    %111 = vmatpush.msra.mxu0 %v96
    %112 = vmatpush.msra.mxu0 %v95
    %113 = vmatpush.msra.mxu0 %v94
    %114 = vmatpush.msra.mxu0 %v93
    %115 = vmatpush.msra.mxu0 %v92
    %116 = vmatpush.msra.mxu0 %v91
    %117 = vmatpush.msra.mxu0 %v90
    %118 = vmatpush.msra.mxu0 %v89
    %119 = vmatpush.msra.mxu0 %v88
    %120 = vmatpush.msra.mxu0 %v87
    %121 = vmatpush.msra.mxu0 %v86
    %122 = vmatmul.f32.gmra.mxu0 %v85
    %v123 = vpop.f32.mrf.mxu0
    %v124 = vadd.f32 %v104, %v123
    %125 = vdwg.mxu0
    %v126 = vsub.f32 0.0, %v124
    %v127 = vmul.f32 %v126, 1.442695
    %v128 = vpow.pop %v127
    %v129 = vadd.f32 %v128, 1.0
    %v130 = vrcp.pop %v129
    %v131 = vmul.f32 %v129, %v130
    %v132 = vsub.f32 1.0, %v131
    %v133 = vmul.f32 %v130, %v132
    %v134 = vadd.f32 %v130, %v133
    %vm135 = vweird.f32 %v129
    %vm136 = vweird.f32 %v130
    %vm137 = vmor %vm135, %vm136
    %v138 = vsel %vm137, %v130, %v134
    %v139 = vand.u32 2147483647, %v129
    %vm140 = vcmp.eq.f32.partialorder %v139, 8.507059e+37
    %v141 = vand.u32 %v129, 2147483648
    %v142 = vor.u32 1.1754944e-38, %v141
    %v143 = vsel %vm140, %v142, %v138
    %v144 = vld [vmem:[#allocation7] sm:$0xff]
    %v145 = vld [vmem:[#allocation7 + $0x8] sm:$0xff]
    %v146 = vld [vmem:[#allocation7 + $0x10] sm:$0xff]
    %v147 = vld [vmem:[#allocation7 + $0x18] sm:$0xff]
    %v148 = vld [vmem:[#allocation7 + $0x20] sm:$0xff]
    %v149 = vld [vmem:[#allocation7 + $0x28] sm:$0xff]
    %v150 = vld [vmem:[#allocation7 + $0x30] sm:$0xff]
    %v151 = vld [vmem:[#allocation7 + $0x38] sm:$0xff]
    %v152 = vld [vmem:[#allocation7 + $0x40] sm:$0xff]
    %v153 = vld [vmem:[#allocation7 + $0x48] sm:$0xff]
    %v154 = vld [vmem:[#allocation7 + $0x50] sm:$0xff]
    %v155 = vld [vmem:[#allocation7 + $0x58] sm:$0xff]
    %v156 = vld [vmem:[#allocation7 + $0x60] sm:$0xff]
    %v157 = vld [vmem:[#allocation7 + $0x68] sm:$0xff]
    %v158 = vld [vmem:[#allocation7 + $0x70] sm:$0xff]
    %v159 = vld [vmem:[#allocation7 + $0x78] sm:$0xff]
    %v160 = vld [vmem:[%s4] sm:$0x1]
    %v162 = vperm.slane %v160, 0
    %164 = vmatpush.msra.mxu0 %v159
    %165 = vmatpush.msra.mxu0 %v158
    %166 = vmatpush.msra.mxu0 %v157
    %167 = vmatpush.msra.mxu0 %v156
    %168 = vmatpush.msra.mxu0 %v155
    %169 = vmatpush.msra.mxu0 %v154
    %170 = vmatpush.msra.mxu0 %v153
    %171 = vmatpush.msra.mxu0 %v152
    %172 = vmatpush.msra.mxu0 %v151
    %173 = vmatpush.msra.mxu0 %v150
    %174 = vmatpush.msra.mxu0 %v149
    %175 = vmatpush.msra.mxu0 %v148
    %176 = vmatpush.msra.mxu0 %v147
    %177 = vmatpush.msra.mxu0 %v146
    %178 = vmatpush.msra.mxu0 %v145
    %179 = vmatpush.msra.mxu0 %v144
    %180 = vmatmul.f32.gmra.mxu0 %v143
    %v181 = vpop.f32.mrf.mxu0
    %v182 = vadd.f32 %v162, %v181
    %183 = vdwg.mxu0
    %v184 = vsub.f32 0.0, %v182
    %v185 = vmul.f32 %v184, 1.442695
    %v186 = vpow.pop %v185
    %v187 = vadd.f32 %v186, 1.0
    %v188 = vrcp.pop %v187
    %v189 = vmul.f32 %v187, %v188
    %v190 = vsub.f32 1.0, %v189
    %v191 = vmul.f32 %v188, %v190
    %v192 = vadd.f32 %v188, %v191
    %vm193 = vweird.f32 %v187
    %vm194 = vweird.f32 %v188
    %vm195 = vmor %vm193, %vm194
    %v196 = vsel %vm195, %v188, %v192
    %v197 = vand.u32 2147483647, %v187
    %vm198 = vcmp.eq.f32.partialorder %v197, 8.507059e+37
    %v199 = vand.u32 %v187, 2147483648
    %v200 = vor.u32 1.1754944e-38, %v199
    %v201 = vsel %vm198, %v200, %v196
    %v202 = vld [vmem:[#allocation8] sm:$0xff]
    %v203 = vld [vmem:[#allocation8 + $0x8] sm:$0xff]
    %v204 = vld [vmem:[#allocation8 + $0x10] sm:$0xff]
    %v205 = vld [vmem:[#allocation8 + $0x18] sm:$0xff]
    %v206 = vld [vmem:[#allocation8 + $0x20] sm:$0xff]
    %v207 = vld [vmem:[#allocation8 + $0x28] sm:$0xff]
    %v208 = vld [vmem:[#allocation8 + $0x30] sm:$0xff]
    %v209 = vld [vmem:[#allocation8 + $0x38] sm:$0xff]
    %v210 = vld [vmem:[#allocation8 + $0x40] sm:$0xff]
    %v211 = vld [vmem:[#allocation8 + $0x48] sm:$0xff]
    %v212 = vld [vmem:[#allocation8 + $0x50] sm:$0xff]
    %v213 = vld [vmem:[#allocation8 + $0x58] sm:$0xff]
    %v214 = vld [vmem:[#allocation8 + $0x60] sm:$0xff]
    %v215 = vld [vmem:[#allocation8 + $0x68] sm:$0xff]
    %v216 = vld [vmem:[#allocation8 + $0x70] sm:$0xff]
    %v217 = vld [vmem:[#allocation8 + $0x78] sm:$0xff]
    %218 = vmatpush.msra.mxu0 %v217
    %219 = vmatpush.msra.mxu0 %v216
    %220 = vmatpush.msra.mxu0 %v215
    %221 = vmatpush.msra.mxu0 %v214
    %222 = vmatpush.msra.mxu0 %v213
    %223 = vmatpush.msra.mxu0 %v212
    %224 = vmatpush.msra.mxu0 %v211
    %225 = vmatpush.msra.mxu0 %v210
    %226 = vmatpush.msra.mxu0 %v209
    %227 = vmatpush.msra.mxu0 %v208
    %228 = vmatpush.msra.mxu0 %v207
    %229 = vmatpush.msra.mxu0 %v206
    %230 = vmatpush.msra.mxu0 %v205
    %231 = vmatpush.msra.mxu0 %v204
    %232 = vmatpush.msra.mxu0 %v203
    %233 = vmatpush.msra.mxu0 %v202
    %234 = vmatmul.f32.gmra.mxu0 %v201
    %v235 = vpop.f32.mrf.mxu0
    %v236 = vadd.f32 0.0, %v235
    %237 = vdwg.mxu0
    %238 = vst [vmem:[#allocation10] sm:$0xff] %v236
    // Predicated region
    $region42: #{tpu_custom_call.1} parent=1 // pred_check
      _
    $region43: #{tpu_custom_call.1} parent=1 // pred_check_branch
      %240 = sbr.rel (0) target = $region45
    $region44: #{tpu_custom_call.1} parent=1 // pred_region
      %242 = vsyncadd [#allocation4], 0
      %s244 = sshll.u32 [#allocation10], 4
      %s245 = int_to_ptr.vmem [resolvable:$true] %s244
      %s246 = sshll.u32 %s6, 4
      %s247 = int_to_ptr.hbm [resolvable:$true] %s246
      %249 = dma.vmem_to_hbm [thread:$0]  %s245, 128, %s247, [#allocation4]
    $region45: #{tpu_custom_call.1} parent=1 // pred_fallthru
      _
    // Predicated region
    $region46: #{tpu_custom_call.1} parent=1 // pred_check
      _
    $region47: #{tpu_custom_call.1} parent=1 // pred_check_branch
      %251 = sbr.rel (0) target = $region49
    $region48: #{tpu_custom_call.1} parent=1 // pred_region
      %253 = dma.done [#allocation4], 128
    $region49: #{tpu_custom_call.1} parent=1 // pred_fallthru
      _
    %254 = vsyncpa [#allocation3], 1
    %255 = vsyncpa [#allocation6], 1
    %256 = vsyncpa [#allocation9], 1
    %257 = vsyncpa [#allocation4], 1

</llo_original>
